<compile_context>
chip_gen: v5e
topology: v5e:2x2
jax: 0.10.0
libtpu: 0.0.40
codegen_flags: <defaults>
</compile_context>

<pallas_src>
import functools

import jax
import jax.numpy as jnp
from jax.experimental import pallas as pl
from jax.experimental.pallas import tpu as pltpu

K = 3  # TAGConv default number of hops


def _tagcn_kernel(x_ref, a_ref, w_ref, b_ref, o_ref,
                  ax_ref, hops1_ref, hops2_ref, *, n, fi, hd, nc):
    kp1 = K + 1
    f32 = jnp.float32

    a = a_ref[...]                                   # [N, N]
    x = x_ref[...]                                   # [N, F]

    # ---- shared propagation prep: one batched MXU dot gives A^2 and A x ----
    ax_ref[:, :n] = a
    ax_ref[:, n:] = x
    r = jnp.dot(a, ax_ref[...], preferred_element_type=f32)   # [N, N+F] = [A^2 | A x]
    a2 = r[:, :n]                                              # shared by both layers

    # ---- TAGConv layer 1: hop slab [x | A x | A^2 x | A^3 x] ----
    hops1_ref[:, :fi] = x
    hops1_ref[:, fi:2 * fi] = r[:, n:]
    hops1_ref[:, 2 * fi:] = jnp.dot(a2, hops1_ref[:, :2 * fi],
                                    preferred_element_type=f32)  # [A^2 x | A^3 x]
    pre1 = jnp.dot(hops1_ref[...], w_ref[:kp1 * fi, :hd],
                   preferred_element_type=f32) + b_ref[:, :hd]
    hid = jnp.maximum(pre1, 0.0)                     # ReLU, [N, H]

    # F.dropout(x, training=self.training): identity in eval mode.
    # TODO(synk): training-mode dropout (random mask + 1/(1-p) scale) not implemented.

    # ---- TAGConv layer 2: hop slab [h | A h | A^2 h | A^3 h] ----
    hops2_ref[:, :hd] = hid
    hops2_ref[:, hd:2 * hd] = jnp.dot(a, hid, preferred_element_type=f32)
    hops2_ref[:, 2 * hd:] = jnp.dot(a2, hops2_ref[:, :2 * hd],
                                    preferred_element_type=f32)  # [A^2 h | A^3 h]
    logits = jnp.dot(hops2_ref[...], w_ref[:kp1 * hd, hd:hd + nc],
                     preferred_element_type=f32) + b_ref[:, hd:hd + nc]

    # ---- log_softmax over dim=1 (class axis) ----
    m = jnp.max(logits, axis=-1, keepdims=True)
    z = logits - m
    o_ref[...] = z - jnp.log(jnp.sum(jnp.exp(z), axis=-1, keepdims=True))


def tagcn_net(x, a_hat, w1, b1, w2, b2):
    n, fi = x.shape
    kp1, _, hd = w1.shape
    nc = w2.shape[-1]
    assert kp1 == K + 1 and w2.shape[0] == kp1 and w2.shape[1] == hd

    # Pack parameters: one weight slab + one bias slab -> 4 input DMAs (was 6).
    rows = max(kp1 * fi, kp1 * hd)
    w_slab = jnp.zeros((rows, hd + nc), jnp.float32)
    w_slab = w_slab.at[:kp1 * fi, :hd].set(w1.astype(jnp.float32).reshape(kp1 * fi, hd))
    w_slab = w_slab.at[:kp1 * hd, hd:].set(w2.astype(jnp.float32).reshape(kp1 * hd, nc))
    b_slab = jnp.concatenate(
        [b1.reshape(1, hd), b2.reshape(1, nc)], axis=1).astype(jnp.float32)

    flops = 2 * n * (
        n * (n + fi)           # A @ [A | x]
        + n * (2 * fi)         # A^2 @ [x | A x]
        + (kp1 * fi) * hd      # layer-1 fused projection
        + n * hd               # A @ h
        + n * (2 * hd)         # A^2 @ [h | A h]
        + (kp1 * hd) * nc)     # layer-2 fused projection
    bytes_accessed = 4 * (x.size + a_hat.size + w_slab.size + b_slab.size + n * nc)

    vmem = pl.BlockSpec(memory_space=pltpu.MemorySpace.VMEM)
    kernel = functools.partial(_tagcn_kernel, n=n, fi=fi, hd=hd, nc=nc)
    return pl.pallas_call(
        kernel,
        out_shape=jax.ShapeDtypeStruct((n, nc), jnp.float32),
        in_specs=[vmem, vmem, vmem, vmem],
        out_specs=vmem,
        scratch_shapes=[
            pltpu.VMEM((n, n + fi), jnp.float32),     # [A | x] batched-RHS slab
            pltpu.VMEM((n, kp1 * fi), jnp.float32),   # layer-1 hop slab
            pltpu.VMEM((n, kp1 * hd), jnp.float32),   # layer-2 hop slab
        ],
        cost_estimate=pl.CostEstimate(
            flops=flops,
            transcendentals=n * (nc + 1),
            bytes_accessed=bytes_accessed),
    )(x.astype(jnp.float32), a_hat.astype(jnp.float32), w_slab, b_slab)


def build_normalized_adjacency(edge_index, num_nodes):
    """Dense symmetric gcn_norm without self-loops: D^{-1/2} A D^{-1/2}."""
    src, dst = edge_index
    a = jnp.zeros((num_nodes, num_nodes), jnp.float32)
    a = a.at[src, dst].set(1.0)
    a = jnp.maximum(a, a.T)  # make undirected
    deg = jnp.sum(a, axis=1)
    d_inv_sqrt = jnp.where(deg > 0, 1.0 / jnp.sqrt(jnp.maximum(deg, 1e-12)), 0.0)
    return a * d_inv_sqrt[:, None] * d_inv_sqrt[None, :]


def tagcn_reference(x, a_hat, w1, b1, w2, b2):
    """Pure-JAX f32 reference of the same forward pass."""
    def tagconv(feat, w, b):
        out = feat @ w[0]
        hop = feat
        for k in range(1, K + 1):
            hop = a_hat @ hop
            out = out + hop @ w[k]
        return out + b
    hid = jax.nn.relu(tagconv(x, w1, b1))
    logits = tagconv(hid, w2, b2)
    return jax.nn.log_softmax(logits, axis=1)


if __name__ == "__main__":
    key = jax.random.PRNGKey(0)
    k_x, k_e, k_w1, k_b1, k_w2, k_b2 = jax.random.split(key, 6)

    # Small synthetic "Planetoid-like" graph.
    N = 64          # nodes
    F_IN = 32       # input features (dataset.num_features)
    H = 16          # hidden size of conv1
    C = 8           # classes (dataset.num_classes)
    E = 256         # directed edges

    # Node features (NormalizeFeatures: row-normalized non-negative features).
    x = jax.random.uniform(k_x, (N, F_IN), jnp.float32)
    x = x / jnp.maximum(jnp.sum(x, axis=1, keepdims=True), 1e-12)

    # Random edge_index [2, E] and dense normalized adjacency.
    edge_index = jax.random.randint(k_e, (2, E), 0, N)
    a_hat = build_normalized_adjacency(edge_index, N)

    # Deterministic parameter init (TAGConv has K+1 weight mats per layer + bias).
    w1 = jax.random.normal(k_w1, (K + 1, F_IN, H), jnp.float32) * (1.0 / jnp.sqrt(F_IN))
    b1 = jax.random.normal(k_b1, (1, H), jnp.float32) * 0.01
    w2 = jax.random.normal(k_w2, (K + 1, H, C), jnp.float32) * (1.0 / jnp.sqrt(H))
    b2 = jax.random.normal(k_b2, (1, C), jnp.float32) * 0.01

    out = jax.block_until_ready(tagcn_net(x, a_hat, w1, b1, w2, b2))
    ref = jax.block_until_ready(tagcn_reference(x, a_hat, w1, b1, w2, b2))

    # Sanity: shape, finiteness, rows of exp(log-probs) sum to 1, matches f32 ref.
    assert out.shape == (N, C)
    assert bool(jnp.all(jnp.isfinite(out)))
    assert bool(jnp.allclose(jnp.sum(jnp.exp(out), axis=1), 1.0, atol=1e-4))
    assert bool(jnp.allclose(out, ref, atol=2e-2, rtol=2e-2))
    print("KERNEL_OK")
</pallas_src>

<mosaic_0001>
module attributes {stable_mosaic.version = 11 : i64} {
  func.func @_tagcn_kernel(%arg0: memref<64x32xf32, #tpu.memory_space<vmem>>, %arg1: memref<64x64xf32, #tpu.memory_space<vmem>>, %arg2: memref<128x24xf32, #tpu.memory_space<vmem>>, %arg3: memref<1x24xf32, #tpu.memory_space<vmem>>, %arg4: memref<64x8xf32, #tpu.memory_space<vmem>>, %arg5: memref<64x96xf32, #tpu.memory_space<vmem>>, %arg6: memref<64x128xf32, #tpu.memory_space<vmem>>, %arg7: memref<64x64xf32, #tpu.memory_space<vmem>>) attributes {dimension_semantics = [], scalar_prefetch = 0 : i64, scratch_operands = 3 : i64, tpu.core_type = #tpu.core_type<tc>} {
    %c0 = arith.constant 0 : index
    %c0_0 = arith.constant 0 : index
    %0 = vector.load %arg1[%c0, %c0_0] : memref<64x64xf32, #tpu.memory_space<vmem>>, vector<64x64xf32>
    %c0_1 = arith.constant 0 : index
    %c0_2 = arith.constant 0 : index
    %1 = vector.load %arg0[%c0_1, %c0_2] : memref<64x32xf32, #tpu.memory_space<vmem>>, vector<64x32xf32>
    %c0_3 = arith.constant 0 : index
    %c0_4 = arith.constant 0 : index
    %2 = vector.load %arg5[%c0_3, %c0_4] : memref<64x96xf32, #tpu.memory_space<vmem>>, vector<64x64xf32>
    tpu.vector_store %arg5[%c0_3, %c0_4], %0 {strides = array<i32>} : memref<64x96xf32, #tpu.memory_space<vmem>>, vector<64x64xf32>,
    %c0_5 = arith.constant 0 : index
    %c64 = arith.constant 64 : index
    %3 = vector.load %arg5[%c0_5, %c64] : memref<64x96xf32, #tpu.memory_space<vmem>>, vector<64x32xf32>
    tpu.vector_store %arg5[%c0_5, %c64], %1 {strides = array<i32>} : memref<64x96xf32, #tpu.memory_space<vmem>>, vector<64x32xf32>,
    %c0_6 = arith.constant 0 : index
    %c0_7 = arith.constant 0 : index
    %4 = vector.load %arg5[%c0_6, %c0_7] : memref<64x96xf32, #tpu.memory_space<vmem>>, vector<64x96xf32>
    %cst = arith.constant dense<0.000000e+00> : vector<64x96xf32>
    %5 = tpu.matmul %0, %4, %cst {dimension_numbers = #tpu.dot_dimension_numbers<[1], [0], [0], [1], [0, 0, 1, 1], [], []>} : vector<64x64xf32>, vector<64x96xf32>, vector<64x96xf32> -> vector<64x96xf32>
    %6 = vector.extract_strided_slice %5 {offsets = [0, 0], sizes = [64, 64], strides = [1, 1]} : vector<64x96xf32> to vector<64x64xf32>
    %c0_8 = arith.constant 0 : index
    %c0_9 = arith.constant 0 : index
    %7 = vector.load %arg6[%c0_8, %c0_9] : memref<64x128xf32, #tpu.memory_space<vmem>>, vector<64x32xf32>
    tpu.vector_store %arg6[%c0_8, %c0_9], %1 {strides = array<i32>} : memref<64x128xf32, #tpu.memory_space<vmem>>, vector<64x32xf32>,
    %8 = vector.extract_strided_slice %5 {offsets = [0, 64], sizes = [64, 32], strides = [1, 1]} : vector<64x96xf32> to vector<64x32xf32>
    %c0_10 = arith.constant 0 : index
    %c32 = arith.constant 32 : index
    %9 = vector.load %arg6[%c0_10, %c32] : memref<64x128xf32, #tpu.memory_space<vmem>>, vector<64x32xf32>
    tpu.vector_store %arg6[%c0_10, %c32], %8 {strides = array<i32>} : memref<64x128xf32, #tpu.memory_space<vmem>>, vector<64x32xf32>,
    %c0_11 = arith.constant 0 : index
    %c0_12 = arith.constant 0 : index
    %10 = vector.load %arg6[%c0_11, %c0_12] : memref<64x128xf32, #tpu.memory_space<vmem>>, vector<64x64xf32>
    %cst_13 = arith.constant dense<0.000000e+00> : vector<64x64xf32>
    %11 = tpu.matmul %6, %10, %cst_13 {dimension_numbers = #tpu.dot_dimension_numbers<[1], [0], [0], [1], [0, 0, 1, 1], [], []>} : vector<64x64xf32>, vector<64x64xf32>, vector<64x64xf32> -> vector<64x64xf32>
    %c0_14 = arith.constant 0 : index
    %c64_15 = arith.constant 64 : index
    %12 = vector.load %arg6[%c0_14, %c64_15] : memref<64x128xf32, #tpu.memory_space<vmem>>, vector<64x64xf32>
    tpu.vector_store %arg6[%c0_14, %c64_15], %11 {strides = array<i32>} : memref<64x128xf32, #tpu.memory_space<vmem>>, vector<64x64xf32>,
    %c0_16 = arith.constant 0 : index
    %c0_17 = arith.constant 0 : index
    %13 = vector.load %arg6[%c0_16, %c0_17] : memref<64x128xf32, #tpu.memory_space<vmem>>, vector<64x128xf32>
    %c0_18 = arith.constant 0 : index
    %c0_19 = arith.constant 0 : index
    %14 = vector.load %arg2[%c0_18, %c0_19] : memref<128x24xf32, #tpu.memory_space<vmem>>, vector<128x16xf32>
    %cst_20 = arith.constant dense<0.000000e+00> : vector<64x16xf32>
    %15 = tpu.matmul %13, %14, %cst_20 {dimension_numbers = #tpu.dot_dimension_numbers<[1], [0], [0], [1], [0, 0, 1, 1], [], []>} : vector<64x128xf32>, vector<128x16xf32>, vector<64x16xf32> -> vector<64x16xf32>
    %c0_21 = arith.constant 0 : index
    %c0_22 = arith.constant 0 : index
    %16 = vector.load %arg3[%c0_21, %c0_22] : memref<1x24xf32, #tpu.memory_space<vmem>>, vector<1x16xf32>
    %17 = vector.broadcast %16 : vector<1x16xf32> to vector<64x16xf32>
    %18 = arith.addf %15, %17 : vector<64x16xf32>
    %cst_23 = arith.constant 0.000000e+00 : f32
    %19 = vector.broadcast %cst_23 : f32 to vector<64x16xf32>
    %20 = arith.maximumf %18, %19 : vector<64x16xf32>
    %c0_24 = arith.constant 0 : index
    %c0_25 = arith.constant 0 : index
    %21 = vector.load %arg7[%c0_24, %c0_25] : memref<64x64xf32, #tpu.memory_space<vmem>>, vector<64x16xf32>
    tpu.vector_store %arg7[%c0_24, %c0_25], %20 {strides = array<i32>} : memref<64x64xf32, #tpu.memory_space<vmem>>, vector<64x16xf32>,
    %cst_26 = arith.constant dense<0.000000e+00> : vector<64x16xf32>
    %22 = tpu.matmul %0, %20, %cst_26 {dimension_numbers = #tpu.dot_dimension_numbers<[1], [0], [0], [1], [0, 0, 1, 1], [], []>} : vector<64x64xf32>, vector<64x16xf32>, vector<64x16xf32> -> vector<64x16xf32>
    %c0_27 = arith.constant 0 : index
    %c16 = arith.constant 16 : index
    %23 = vector.load %arg7[%c0_27, %c16] : memref<64x64xf32, #tpu.memory_space<vmem>>, vector<64x16xf32>
    tpu.vector_store %arg7[%c0_27, %c16], %22 {strides = array<i32>} : memref<64x64xf32, #tpu.memory_space<vmem>>, vector<64x16xf32>,
    %c0_28 = arith.constant 0 : index
    %c0_29 = arith.constant 0 : index
    %24 = vector.load %arg7[%c0_28, %c0_29] : memref<64x64xf32, #tpu.memory_space<vmem>>, vector<64x32xf32>
    %cst_30 = arith.constant dense<0.000000e+00> : vector<64x32xf32>
    %25 = tpu.matmul %6, %24, %cst_30 {dimension_numbers = #tpu.dot_dimension_numbers<[1], [0], [0], [1], [0, 0, 1, 1], [], []>} : vector<64x64xf32>, vector<64x32xf32>, vector<64x32xf32> -> vector<64x32xf32>
    %c0_31 = arith.constant 0 : index
    %c32_32 = arith.constant 32 : index
    %26 = vector.load %arg7[%c0_31, %c32_32] : memref<64x64xf32, #tpu.memory_space<vmem>>, vector<64x32xf32>
    tpu.vector_store %arg7[%c0_31, %c32_32], %25 {strides = array<i32>} : memref<64x64xf32, #tpu.memory_space<vmem>>, vector<64x32xf32>,
    %c0_33 = arith.constant 0 : index
    %c0_34 = arith.constant 0 : index
    %27 = vector.load %arg7[%c0_33, %c0_34] : memref<64x64xf32, #tpu.memory_space<vmem>>, vector<64x64xf32>
    %c0_35 = arith.constant 0 : index
    %c16_36 = arith.constant 16 : index
    %28 = vector.load %arg2[%c0_35, %c16_36] : memref<128x24xf32, #tpu.memory_space<vmem>>, vector<64x8xf32>
    %cst_37 = arith.constant dense<0.000000e+00> : vector<64x8xf32>
    %29 = tpu.matmul %27, %28, %cst_37 {dimension_numbers = #tpu.dot_dimension_numbers<[1], [0], [0], [1], [0, 0, 1, 1], [], []>} : vector<64x64xf32>, vector<64x8xf32>, vector<64x8xf32> -> vector<64x8xf32>
    %c0_38 = arith.constant 0 : index
    %c16_39 = arith.constant 16 : index
    %30 = vector.load %arg3[%c0_38, %c16_39] : memref<1x24xf32, #tpu.memory_space<vmem>>, vector<1x8xf32>
    %31 = vector.broadcast %30 : vector<1x8xf32> to vector<64x8xf32>
    %32 = arith.addf %29, %31 : vector<64x8xf32>
    %cst_40 = arith.constant dense<0xFF800000> : vector<64xf32>
    %33 = vector.multi_reduction <maximumf>, %32, %cst_40 [1] : vector<64x8xf32> to vector<64xf32>
    %34 = vector.shape_cast %33 : vector<64xf32> to vector<64x1xf32>
    %35 = vector.broadcast %34 : vector<64x1xf32> to vector<64x8xf32>
    %36 = arith.subf %32, %35 : vector<64x8xf32>
    %37 = math.exp %36 : vector<64x8xf32>
    %cst_41 = arith.constant dense<0.000000e+00> : vector<64xf32>
    %38 = vector.multi_reduction <add>, %37, %cst_41 [1] : vector<64x8xf32> to vector<64xf32>
    %39 = vector.shape_cast %38 : vector<64xf32> to vector<64x1xf32>
    %40 = math.log %39 : vector<64x1xf32>
    %41 = vector.broadcast %40 : vector<64x1xf32> to vector<64x8xf32>
    %42 = arith.subf %36, %41 : vector<64x8xf32>
    %c0_42 = arith.constant 0 : index
    %c0_43 = arith.constant 0 : index
    %43 = vector.load %arg4[%c0_42, %c0_43] : memref<64x8xf32, #tpu.memory_space<vmem>>, vector<64x8xf32>
    tpu.vector_store %arg4[%c0_42, %c0_43], %42 {strides = array<i32>} : memref<64x8xf32, #tpu.memory_space<vmem>>, vector<64x8xf32>,
    return
  }
}

</mosaic_0001>

<llo_original>
// kernel: tpu_custom_call.1
$region0: #{tpu_custom_call.1}
  #allocation0 [shape = 'u32[]', space=smem, size = 0x4, offset = 0x4, fixed_abs, tag = 'smem constant byte address 0x4 - core index']
  #allocation1 [shape = 'u32[72,128]{1,0:T(1,128)}', space=vmem, size = 0x9000, scoped, tag = 'internal scratch']
  #allocation2 [shape = 'f32[64,96]{1,0:T(8,128)}', space=vmem, size = 0x8000, scoped, tag = 'scratch operand']
  #allocation3 [shape = 'f32[64,128]{1,0:T(8,128)}', space=vmem, size = 0x8000, scoped, tag = 'scratch operand']
  #allocation4 [shape = 'f32[64,64]{1,0:T(8,128)}', space=vmem, size = 0x8000, scoped, tag = 'scratch operand']
  %s0 = inlined_call_operand.vmem [shape: f32[64,32], index: 0, kind: input, shape index: {}]
  %s1 = inlined_call_operand.vmem [shape: f32[64,64], index: 1, kind: input, shape index: {}]
  %s2 = inlined_call_operand.vmem [shape: f32[128,24], index: 2, kind: input, shape index: {}]
  %s3 = inlined_call_operand.vmem [shape: f32[1,24], index: 3, kind: input, shape index: {}]
  %s4 = inlined_call_operand.vmem [shape: f32[64,8], index: 4, kind: output, shape index: {}]
  %s5 = sld [smem:[#allocation0]]
  $region26: #{tpu_custom_call.1} parent=0
    _
  %s7 = ssub.s32 1, %s5
  %s8 = scalar_select 0, %s7, %s5
  // Predicated region
  $region2: #{tpu_custom_call.1} parent=0 // pred_check
    _
  $region3: #{tpu_custom_call.1} parent=0 // pred_check_branch
    %10 = sbr.rel (0) target = $region5
  $region4: #{tpu_custom_call.1} parent=0 // pred_region
    _
  $region5: #{tpu_custom_call.1} parent=0 // pred_fallthru
    _
  // Predicated region
  $region6: #{tpu_custom_call.1} parent=0 // pred_check
    _
  $region7: #{tpu_custom_call.1} parent=0 // pred_check_branch
    %12 = sbr.rel (0) target = $region9
  $region8: #{tpu_custom_call.1} parent=0 // pred_region
    _
  $region9: #{tpu_custom_call.1} parent=0 // pred_fallthru
    _
  // Predicated region
  $region10: #{tpu_custom_call.1} parent=0 // pred_check
    _
  $region11: #{tpu_custom_call.1} parent=0 // pred_check_branch
    %14 = sbr.rel (0) target = $region13
  $region12: #{tpu_custom_call.1} parent=0 // pred_region
    _
  $region13: #{tpu_custom_call.1} parent=0 // pred_fallthru
    _
  // Predicated region
  $region14: #{tpu_custom_call.1} parent=0 // pred_check
    _
  $region15: #{tpu_custom_call.1} parent=0 // pred_check_branch
    %16 = sbr.rel (0) target = $region17
  $region16: #{tpu_custom_call.1} parent=0 // pred_region
    _
  $region17: #{tpu_custom_call.1} parent=0 // pred_fallthru
    _
  %v17 = vld [vmem:[%s1] sm:$0xff]
  %v18 = vld [vmem:[%s1 + $0x8] sm:$0xff]
  %v19 = vld [vmem:[%s1 + $0x10] sm:$0xff]
  %v20 = vld [vmem:[%s1 + $0x18] sm:$0xff]
  %v21 = vld [vmem:[%s1 + $0x20] sm:$0xff]
  %v22 = vld [vmem:[%s1 + $0x28] sm:$0xff]
  %v23 = vld [vmem:[%s1 + $0x30] sm:$0xff]
  %v24 = vld [vmem:[%s1 + $0x38] sm:$0xff]
  %v25 = vld [vmem:[%s0] sm:$0xff]
  %v26 = vld [vmem:[%s0 + $0x8] sm:$0xff]
  %v27 = vld [vmem:[%s0 + $0x10] sm:$0xff]
  %v28 = vld [vmem:[%s0 + $0x18] sm:$0xff]
  %v29 = vld [vmem:[%s0 + $0x20] sm:$0xff]
  %v30 = vld [vmem:[%s0 + $0x28] sm:$0xff]
  %v31 = vld [vmem:[%s0 + $0x30] sm:$0xff]
  %v32 = vld [vmem:[%s0 + $0x38] sm:$0xff]
  %vm33 = vcmask 523264
  %34 = vst.msk [vmem:[#allocation2] sm:$0xff] %vm33, %v17
  %35 = vst.msk [vmem:[#allocation2 + $0x8] sm:$0xff] %vm33, %v18
  %36 = vst.msk [vmem:[#allocation2 + $0x10] sm:$0xff] %vm33, %v19
  %37 = vst.msk [vmem:[#allocation2 + $0x18] sm:$0xff] %vm33, %v20
  %38 = vst.msk [vmem:[#allocation2 + $0x20] sm:$0xff] %vm33, %v21
  %39 = vst.msk [vmem:[#allocation2 + $0x28] sm:$0xff] %vm33, %v22
  %40 = vst.msk [vmem:[#allocation2 + $0x30] sm:$0xff] %vm33, %v23
  %41 = vst.msk [vmem:[#allocation2 + $0x38] sm:$0xff] %vm33, %v24
  %50 = vrot.lane.b32.xlu0 %v25, 64
  %v51 = vpop.permute.xlu0 %50
  %52 = vrot.lane.b32.xlu0 %v26, 64
  %v53 = vpop.permute.xlu0 %52
  %54 = vrot.lane.b32.xlu0 %v27, 64
  %v55 = vpop.permute.xlu0 %54
  %56 = vrot.lane.b32.xlu0 %v28, 64
  %v57 = vpop.permute.xlu0 %56
  %58 = vrot.lane.b32.xlu0 %v29, 64
  %v59 = vpop.permute.xlu0 %58
  %60 = vrot.lane.b32.xlu0 %v30, 64
  %v61 = vpop.permute.xlu0 %60
  %62 = vrot.lane.b32.xlu0 %v31, 64
  %v63 = vpop.permute.xlu0 %62
  %64 = vrot.lane.b32.xlu0 %v32, 64
  %v65 = vpop.permute.xlu0 %64
  %vm74 = vcmask 785920
  %75 = vst.msk [vmem:[#allocation2] sm:$0xff] %vm74, %v51
  %76 = vst.msk [vmem:[#allocation2 + $0x8] sm:$0xff] %vm74, %v53
  %77 = vst.msk [vmem:[#allocation2 + $0x10] sm:$0xff] %vm74, %v55
  %78 = vst.msk [vmem:[#allocation2 + $0x18] sm:$0xff] %vm74, %v57
  %79 = vst.msk [vmem:[#allocation2 + $0x20] sm:$0xff] %vm74, %v59
  %80 = vst.msk [vmem:[#allocation2 + $0x28] sm:$0xff] %vm74, %v61
  %81 = vst.msk [vmem:[#allocation2 + $0x30] sm:$0xff] %vm74, %v63
  %82 = vst.msk [vmem:[#allocation2 + $0x38] sm:$0xff] %vm74, %v65
  %v83 = vld [vmem:[#allocation2] sm:$0xff]
  %v84 = vld [vmem:[#allocation2 + $0x8] sm:$0xff]
  %v85 = vld [vmem:[#allocation2 + $0x10] sm:$0xff]
  %v86 = vld [vmem:[#allocation2 + $0x18] sm:$0xff]
  %v87 = vld [vmem:[#allocation2 + $0x20] sm:$0xff]
  %v88 = vld [vmem:[#allocation2 + $0x28] sm:$0xff]
  %v89 = vld [vmem:[#allocation2 + $0x30] sm:$0xff]
  %v90 = vld [vmem:[#allocation2 + $0x38] sm:$0xff]
  %v92 = vsel %vm33, %v17, 0
  %v95 = vsel %vm33, %v18, 0
  %v98 = vsel %vm33, %v19, 0
  %v101 = vsel %vm33, %v20, 0
  %v104 = vsel %vm33, %v21, 0
  %v107 = vsel %vm33, %v22, 0
  %v110 = vsel %vm33, %v23, 0
  %v113 = vsel %vm33, %v24, 0
  %115 = vmatpush.msra.mxu0 0.0
  %116 = vmatpush.msra.mxu0 0.0
  %117 = vmatpush.msra.mxu0 0.0
  %118 = vmatpush.msra.mxu0 0.0
  %119 = vmatpush.msra.mxu0 0.0
  %120 = vmatpush.msra.mxu0 0.0
  %121 = vmatpush.msra.mxu0 0.0
  %122 = vmatpush.msra.mxu0 0.0
  %123 = vmatpush.msra.mxu0 %v90
  %124 = vmatpush.msra.mxu0 %v89
  %125 = vmatpush.msra.mxu0 %v88
  %126 = vmatpush.msra.mxu0 %v87
  %127 = vmatpush.msra.mxu0 %v86
  %128 = vmatpush.msra.mxu0 %v85
  %129 = vmatpush.msra.mxu0 %v84
  %130 = vmatpush.msra.mxu0 %v83
  %131 = vmatmul.f32.gmra.mxu0 %v92
  %v132 = vpop.f32.mrf.mxu0
  %v133 = vadd.f32 0.0, %v132
  %134 = vmatmul.f32.gmra.mxu0 %v95
  %v135 = vpop.f32.mrf.mxu0
  %v136 = vadd.f32 0.0, %v135
  %137 = vmatmul.f32.gmra.mxu0 %v98
  %v138 = vpop.f32.mrf.mxu0
  %v139 = vadd.f32 0.0, %v138
  %140 = vmatmul.f32.gmra.mxu0 %v101
  %v141 = vpop.f32.mrf.mxu0
  %v142 = vadd.f32 0.0, %v141
  %143 = vmatmul.f32.gmra.mxu0 %v104
  %v144 = vpop.f32.mrf.mxu0
  %v145 = vadd.f32 0.0, %v144
  %146 = vmatmul.f32.gmra.mxu0 %v107
  %v147 = vpop.f32.mrf.mxu0
  %v148 = vadd.f32 0.0, %v147
  %149 = vmatmul.f32.gmra.mxu0 %v110
  %v150 = vpop.f32.mrf.mxu0
  %v151 = vadd.f32 0.0, %v150
  %152 = vmatmul.f32.gmra.mxu0 %v113
  %v153 = vpop.f32.mrf.mxu0
  %v154 = vadd.f32 0.0, %v153
  %155 = vdwg.mxu0
  %vm156 = vcmask 261120
  %157 = vst.msk [vmem:[#allocation3] sm:$0xff] %vm156, %v25
  %158 = vst.msk [vmem:[#allocation3 + $0x8] sm:$0xff] %vm156, %v26
  %159 = vst.msk [vmem:[#allocation3 + $0x10] sm:$0xff] %vm156, %v27
  %160 = vst.msk [vmem:[#allocation3 + $0x18] sm:$0xff] %vm156, %v28
  %161 = vst.msk [vmem:[#allocation3 + $0x20] sm:$0xff] %vm156, %v29
  %162 = vst.msk [vmem:[#allocation3 + $0x28] sm:$0xff] %vm156, %v30
  %163 = vst.msk [vmem:[#allocation3 + $0x30] sm:$0xff] %vm156, %v31
  %164 = vst.msk [vmem:[#allocation3 + $0x38] sm:$0xff] %vm156, %v32
  %173 = vrot.lane.b32.xlu0 %v133, 96
  %v174 = vpop.permute.xlu0 %173
  %175 = vrot.lane.b32.xlu0 %v136, 96
  %v176 = vpop.permute.xlu0 %175
  %177 = vrot.lane.b32.xlu0 %v139, 96
  %v178 = vpop.permute.xlu0 %177
  %179 = vrot.lane.b32.xlu0 %v142, 96
  %v180 = vpop.permute.xlu0 %179
  %181 = vrot.lane.b32.xlu0 %v145, 96
  %v182 = vpop.permute.xlu0 %181
  %183 = vrot.lane.b32.xlu0 %v148, 96
  %v184 = vpop.permute.xlu0 %183
  %185 = vrot.lane.b32.xlu0 %v151, 96
  %v186 = vpop.permute.xlu0 %185
  %187 = vrot.lane.b32.xlu0 %v154, 96
  %v188 = vpop.permute.xlu0 %187
  %vm197 = vcmask 523520
  %198 = vst.msk [vmem:[#allocation3] sm:$0xff] %vm197, %v174
  %199 = vst.msk [vmem:[#allocation3 + $0x8] sm:$0xff] %vm197, %v176
  %200 = vst.msk [vmem:[#allocation3 + $0x10] sm:$0xff] %vm197, %v178
  %201 = vst.msk [vmem:[#allocation3 + $0x18] sm:$0xff] %vm197, %v180
  %202 = vst.msk [vmem:[#allocation3 + $0x20] sm:$0xff] %vm197, %v182
  %203 = vst.msk [vmem:[#allocation3 + $0x28] sm:$0xff] %vm197, %v184
  %204 = vst.msk [vmem:[#allocation3 + $0x30] sm:$0xff] %vm197, %v186
  %205 = vst.msk [vmem:[#allocation3 + $0x38] sm:$0xff] %vm197, %v188
  %v206 = vld [vmem:[#allocation3] sm:$0xff]
  %v207 = vld [vmem:[#allocation3 + $0x8] sm:$0xff]
  %v208 = vld [vmem:[#allocation3 + $0x10] sm:$0xff]
  %v209 = vld [vmem:[#allocation3 + $0x18] sm:$0xff]
  %v210 = vld [vmem:[#allocation3 + $0x20] sm:$0xff]
  %v211 = vld [vmem:[#allocation3 + $0x28] sm:$0xff]
  %v212 = vld [vmem:[#allocation3 + $0x30] sm:$0xff]
  %v213 = vld [vmem:[#allocation3 + $0x38] sm:$0xff]
  %v214 = vsel %vm33, %v133, 0
  %v216 = vsel %vm33, %v136, 0
  %v218 = vsel %vm33, %v139, 0
  %v220 = vsel %vm33, %v142, 0
  %v222 = vsel %vm33, %v145, 0
  %v224 = vsel %vm33, %v148, 0
  %v226 = vsel %vm33, %v151, 0
  %v228 = vsel %vm33, %v154, 0
  %230 = vmatpush.msra.mxu0 0.0
  %231 = vmatpush.msra.mxu0 0.0
  %232 = vmatpush.msra.mxu0 0.0
  %233 = vmatpush.msra.mxu0 0.0
  %234 = vmatpush.msra.mxu0 0.0
  %235 = vmatpush.msra.mxu0 0.0
  %236 = vmatpush.msra.mxu0 0.0
  %237 = vmatpush.msra.mxu0 0.0
  %238 = vmatpush.msra.mxu0 %v213
  %239 = vmatpush.msra.mxu0 %v212
  %240 = vmatpush.msra.mxu0 %v211
  %241 = vmatpush.msra.mxu0 %v210
  %242 = vmatpush.msra.mxu0 %v209
  %243 = vmatpush.msra.mxu0 %v208
  %244 = vmatpush.msra.mxu0 %v207
  %245 = vmatpush.msra.mxu0 %v206
  %246 = vmatmul.f32.gmra.mxu0 %v214
  %v247 = vpop.f32.mrf.mxu0
  %v248 = vadd.f32 0.0, %v247
  %249 = vmatmul.f32.gmra.mxu0 %v216
  %v250 = vpop.f32.mrf.mxu0
  %v251 = vadd.f32 0.0, %v250
  %252 = vmatmul.f32.gmra.mxu0 %v218
  %v253 = vpop.f32.mrf.mxu0
  %v254 = vadd.f32 0.0, %v253
  %255 = vmatmul.f32.gmra.mxu0 %v220
  %v256 = vpop.f32.mrf.mxu0
  %v257 = vadd.f32 0.0, %v256
  %258 = vmatmul.f32.gmra.mxu0 %v222
  %v259 = vpop.f32.mrf.mxu0
  %v260 = vadd.f32 0.0, %v259
  %261 = vmatmul.f32.gmra.mxu0 %v224
  %v262 = vpop.f32.mrf.mxu0
  %v263 = vadd.f32 0.0, %v262
  %264 = vmatmul.f32.gmra.mxu0 %v226
  %v265 = vpop.f32.mrf.mxu0
  %v266 = vadd.f32 0.0, %v265
  %267 = vmatmul.f32.gmra.mxu0 %v228
  %v268 = vpop.f32.mrf.mxu0
  %v269 = vadd.f32 0.0, %v268
  %270 = vdwg.mxu0
  %279 = vrot.lane.b32.xlu0 %v248, 64
  %v280 = vpop.permute.xlu0 %279
  %281 = vrot.lane.b32.xlu0 %v251, 64
  %v282 = vpop.permute.xlu0 %281
  %283 = vrot.lane.b32.xlu0 %v254, 64
  %v284 = vpop.permute.xlu0 %283
  %285 = vrot.lane.b32.xlu0 %v257, 64
  %v286 = vpop.permute.xlu0 %285
  %287 = vrot.lane.b32.xlu0 %v260, 64
  %v288 = vpop.permute.xlu0 %287
  %289 = vrot.lane.b32.xlu0 %v263, 64
  %v290 = vpop.permute.xlu0 %289
  %291 = vrot.lane.b32.xlu0 %v266, 64
  %v292 = vpop.permute.xlu0 %291
  %293 = vrot.lane.b32.xlu0 %v269, 64
  %v294 = vpop.permute.xlu0 %293
  %vm303 = vcmask 1048064
  %304 = vst.msk [vmem:[#allocation3] sm:$0xff] %vm303, %v280
  %305 = vst.msk [vmem:[#allocation3 + $0x8] sm:$0xff] %vm303, %v282
  %306 = vst.msk [vmem:[#allocation3 + $0x10] sm:$0xff] %vm303, %v284
  %307 = vst.msk [vmem:[#allocation3 + $0x18] sm:$0xff] %vm303, %v286
  %308 = vst.msk [vmem:[#allocation3 + $0x20] sm:$0xff] %vm303, %v288
  %309 = vst.msk [vmem:[#allocation3 + $0x28] sm:$0xff] %vm303, %v290
  %310 = vst.msk [vmem:[#allocation3 + $0x30] sm:$0xff] %vm303, %v292
  %311 = vst.msk [vmem:[#allocation3 + $0x38] sm:$0xff] %vm303, %v294
  %v312 = vld [vmem:[#allocation3] sm:$0xff]
  %v313 = vld [vmem:[#allocation3 + $0x8] sm:$0xff]
  %v314 = vld [vmem:[#allocation3 + $0x10] sm:$0xff]
  %v315 = vld [vmem:[#allocation3 + $0x18] sm:$0xff]
  %v316 = vld [vmem:[#allocation3 + $0x20] sm:$0xff]
  %v317 = vld [vmem:[#allocation3 + $0x28] sm:$0xff]
  %v318 = vld [vmem:[#allocation3 + $0x30] sm:$0xff]
  %v319 = vld [vmem:[#allocation3 + $0x38] sm:$0xff]
  %v320 = vld [vmem:[%s2] sm:$0xff]
  %v321 = vld [vmem:[%s2 + $0x8] sm:$0xff]
  %v322 = vld [vmem:[%s2 + $0x10] sm:$0xff]
  %v323 = vld [vmem:[%s2 + $0x18] sm:$0xff]
  %v324 = vld [vmem:[%s2 + $0x20] sm:$0xff]
  %v325 = vld [vmem:[%s2 + $0x28] sm:$0xff]
  %v326 = vld [vmem:[%s2 + $0x30] sm:$0xff]
  %v327 = vld [vmem:[%s2 + $0x38] sm:$0xff]
  %v328 = vld [vmem:[%s2 + $0x40] sm:$0xff]
  %v329 = vld [vmem:[%s2 + $0x48] sm:$0xff]
  %v330 = vld [vmem:[%s2 + $0x50] sm:$0xff]
  %v331 = vld [vmem:[%s2 + $0x58] sm:$0xff]
  %v332 = vld [vmem:[%s2 + $0x60] sm:$0xff]
  %v333 = vld [vmem:[%s2 + $0x68] sm:$0xff]
  %v334 = vld [vmem:[%s2 + $0x70] sm:$0xff]
  %v335 = vld [vmem:[%s2 + $0x78] sm:$0xff]
  %v336 = vld [vmem:[%s3] sm:$0x1]
  %v338 = vperm.slane %v336, 0
  %340 = vmatpush.msra.mxu0 %v335
  %341 = vmatpush.msra.mxu0 %v334
  %342 = vmatpush.msra.mxu0 %v333
  %343 = vmatpush.msra.mxu0 %v332
  %344 = vmatpush.msra.mxu0 %v331
  %345 = vmatpush.msra.mxu0 %v330
  %346 = vmatpush.msra.mxu0 %v329
  %347 = vmatpush.msra.mxu0 %v328
  %348 = vmatpush.msra.mxu0 %v327
  %349 = vmatpush.msra.mxu0 %v326
  %350 = vmatpush.msra.mxu0 %v325
  %351 = vmatpush.msra.mxu0 %v324
  %352 = vmatpush.msra.mxu0 %v323
  %353 = vmatpush.msra.mxu0 %v322
  %354 = vmatpush.msra.mxu0 %v321
  %355 = vmatpush.msra.mxu0 %v320
  %356 = vmatmul.f32.gmra.mxu0 %v312
  %v357 = vpop.f32.mrf.mxu0
  %v358 = vadd.f32 %v338, %v357
  %359 = vmatmul.f32.gmra.mxu0 %v313
  %v360 = vpop.f32.mrf.mxu0
  %v361 = vadd.f32 %v338, %v360
  %362 = vmatmul.f32.gmra.mxu0 %v314
  %v363 = vpop.f32.mrf.mxu0
  %v364 = vadd.f32 %v338, %v363
  %365 = vmatmul.f32.gmra.mxu0 %v315
  %v366 = vpop.f32.mrf.mxu0
  %v367 = vadd.f32 %v338, %v366
  %368 = vmatmul.f32.gmra.mxu0 %v316
  %v369 = vpop.f32.mrf.mxu0
  %v370 = vadd.f32 %v338, %v369
  %371 = vmatmul.f32.gmra.mxu0 %v317
  %v372 = vpop.f32.mrf.mxu0
  %v373 = vadd.f32 %v338, %v372
  %374 = vmatmul.f32.gmra.mxu0 %v318
  %v375 = vpop.f32.mrf.mxu0
  %v376 = vadd.f32 %v338, %v375
  %377 = vmatmul.f32.gmra.mxu0 %v319
  %v378 = vpop.f32.mrf.mxu0
  %v379 = vadd.f32 %v338, %v378
  %380 = vdwg.mxu0
  %v381 = vmax.f32 %v358, 0.0
  %v382 = vmax.f32 %v361, 0.0
  %v383 = vmax.f32 %v364, 0.0
  %v384 = vmax.f32 %v367, 0.0
  %v385 = vmax.f32 %v370, 0.0
  %v386 = vmax.f32 %v373, 0.0
  %v387 = vmax.f32 %v376, 0.0
  %v388 = vmax.f32 %v379, 0.0
  %vm389 = vcmask 130048
  %390 = vst.msk [vmem:[#allocation4] sm:$0xff] %vm389, %v381
  %391 = vst.msk [vmem:[#allocation4 + $0x8] sm:$0xff] %vm389, %v382
  %392 = vst.msk [vmem:[#allocation4 + $0x10] sm:$0xff] %vm389, %v383
  %393 = vst.msk [vmem:[#allocation4 + $0x18] sm:$0xff] %vm389, %v384
  %394 = vst.msk [vmem:[#allocation4 + $0x20] sm:$0xff] %vm389, %v385
  %395 = vst.msk [vmem:[#allocation4 + $0x28] sm:$0xff] %vm389, %v386
  %396 = vst.msk [vmem:[#allocation4 + $0x30] sm:$0xff] %vm389, %v387
  %397 = vst.msk [vmem:[#allocation4 + $0x38] sm:$0xff] %vm389, %v388
  %398 = vmatpush.msra.mxu0 0.0
  %399 = vmatpush.msra.mxu0 0.0
  %400 = vmatpush.msra.mxu0 0.0
  %401 = vmatpush.msra.mxu0 0.0
  %402 = vmatpush.msra.mxu0 0.0
  %403 = vmatpush.msra.mxu0 0.0
  %404 = vmatpush.msra.mxu0 0.0
  %405 = vmatpush.msra.mxu0 0.0
  %406 = vmatpush.msra.mxu0 %v388
  %407 = vmatpush.msra.mxu0 %v387
  %408 = vmatpush.msra.mxu0 %v386
  %409 = vmatpush.msra.mxu0 %v385
  %410 = vmatpush.msra.mxu0 %v384
  %411 = vmatpush.msra.mxu0 %v383
  %412 = vmatpush.msra.mxu0 %v382
  %413 = vmatpush.msra.mxu0 %v381
  %414 = vmatmul.f32.gmra.mxu0 %v92
  %v415 = vpop.f32.mrf.mxu0
  %v416 = vadd.f32 0.0, %v415
  %417 = vmatmul.f32.gmra.mxu0 %v95
  %v418 = vpop.f32.mrf.mxu0
  %v419 = vadd.f32 0.0, %v418
  %420 = vmatmul.f32.gmra.mxu0 %v98
  %v421 = vpop.f32.mrf.mxu0
  %v422 = vadd.f32 0.0, %v421
  %423 = vmatmul.f32.gmra.mxu0 %v101
  %v424 = vpop.f32.mrf.mxu0
  %v425 = vadd.f32 0.0, %v424
  %426 = vmatmul.f32.gmra.mxu0 %v104
  %v427 = vpop.f32.mrf.mxu0
  %v428 = vadd.f32 0.0, %v427
  %429 = vmatmul.f32.gmra.mxu0 %v107
  %v430 = vpop.f32.mrf.mxu0
  %v431 = vadd.f32 0.0, %v430
  %432 = vmatmul.f32.gmra.mxu0 %v110
  %v433 = vpop.f32.mrf.mxu0
  %v434 = vadd.f32 0.0, %v433
  %435 = vmatmul.f32.gmra.mxu0 %v113
  %v436 = vpop.f32.mrf.mxu0
  %v437 = vadd.f32 0.0, %v436
  %438 = vdwg.mxu0
  %447 = vrot.lane.b32.xlu0 %v416, 16
  %v448 = vpop.permute.xlu0 %447
  %449 = vrot.lane.b32.xlu0 %v419, 16
  %v450 = vpop.permute.xlu0 %449
  %451 = vrot.lane.b32.xlu0 %v422, 16
  %v452 = vpop.permute.xlu0 %451
  %453 = vrot.lane.b32.xlu0 %v425, 16
  %v454 = vpop.permute.xlu0 %453
  %455 = vrot.lane.b32.xlu0 %v428, 16
  %v456 = vpop.permute.xlu0 %455
  %457 = vrot.lane.b32.xlu0 %v431, 16
  %v458 = vpop.permute.xlu0 %457
  %459 = vrot.lane.b32.xlu0 %v434, 16
  %v460 = vpop.permute.xlu0 %459
  %461 = vrot.lane.b32.xlu0 %v437, 16
  %v462 = vpop.permute.xlu0 %461
  %vm471 = vcmask 261248
  %472 = vst.msk [vmem:[#allocation4] sm:$0xff] %vm471, %v448
  %473 = vst.msk [vmem:[#allocation4 + $0x8] sm:$0xff] %vm471, %v450
  %474 = vst.msk [vmem:[#allocation4 + $0x10] sm:$0xff] %vm471, %v452
  %475 = vst.msk [vmem:[#allocation4 + $0x18] sm:$0xff] %vm471, %v454
  %476 = vst.msk [vmem:[#allocation4 + $0x20] sm:$0xff] %vm471, %v456
  %477 = vst.msk [vmem:[#allocation4 + $0x28] sm:$0xff] %vm471, %v458
  %478 = vst.msk [vmem:[#allocation4 + $0x30] sm:$0xff] %vm471, %v460
  %479 = vst.msk [vmem:[#allocation4 + $0x38] sm:$0xff] %vm471, %v462
  %v480 = vld [vmem:[#allocation4] sm:$0xff]
  %v481 = vld [vmem:[#allocation4 + $0x8] sm:$0xff]
  %v482 = vld [vmem:[#allocation4 + $0x10] sm:$0xff]
  %v483 = vld [vmem:[#allocation4 + $0x18] sm:$0xff]
  %v484 = vld [vmem:[#allocation4 + $0x20] sm:$0xff]
  %v485 = vld [vmem:[#allocation4 + $0x28] sm:$0xff]
  %v486 = vld [vmem:[#allocation4 + $0x30] sm:$0xff]
  %v487 = vld [vmem:[#allocation4 + $0x38] sm:$0xff]
  %488 = vmatpush.msra.mxu0 0.0
  %489 = vmatpush.msra.mxu0 0.0
  %490 = vmatpush.msra.mxu0 0.0
  %491 = vmatpush.msra.mxu0 0.0
  %492 = vmatpush.msra.mxu0 0.0
  %493 = vmatpush.msra.mxu0 0.0
  %494 = vmatpush.msra.mxu0 0.0
  %495 = vmatpush.msra.mxu0 0.0
  %496 = vmatpush.msra.mxu0 %v487
  %497 = vmatpush.msra.mxu0 %v486
  %498 = vmatpush.msra.mxu0 %v485
  %499 = vmatpush.msra.mxu0 %v484
  %500 = vmatpush.msra.mxu0 %v483
  %501 = vmatpush.msra.mxu0 %v482
  %502 = vmatpush.msra.mxu0 %v481
  %503 = vmatpush.msra.mxu0 %v480
  %504 = vmatmul.f32.gmra.mxu0 %v214
  %v505 = vpop.f32.mrf.mxu0
  %v506 = vadd.f32 0.0, %v505
  %507 = vmatmul.f32.gmra.mxu0 %v216
  %v508 = vpop.f32.mrf.mxu0
  %v509 = vadd.f32 0.0, %v508
  %510 = vmatmul.f32.gmra.mxu0 %v218
  %v511 = vpop.f32.mrf.mxu0
  %v512 = vadd.f32 0.0, %v511
  %513 = vmatmul.f32.gmra.mxu0 %v220
  %v514 = vpop.f32.mrf.mxu0
  %v515 = vadd.f32 0.0, %v514
  %516 = vmatmul.f32.gmra.mxu0 %v222
  %v517 = vpop.f32.mrf.mxu0
  %v518 = vadd.f32 0.0, %v517
  %519 = vmatmul.f32.gmra.mxu0 %v224
  %v520 = vpop.f32.mrf.mxu0
  %v521 = vadd.f32 0.0, %v520
  %522 = vmatmul.f32.gmra.mxu0 %v226
  %v523 = vpop.f32.mrf.mxu0
  %v524 = vadd.f32 0.0, %v523
  %525 = vmatmul.f32.gmra.mxu0 %v228
  %v526 = vpop.f32.mrf.mxu0
  %v527 = vadd.f32 0.0, %v526
  %528 = vdwg.mxu0
  %537 = vrot.lane.b32.xlu0 %v506, 32
  %v538 = vpop.permute.xlu0 %537
  %539 = vrot.lane.b32.xlu0 %v509, 32
  %v540 = vpop.permute.xlu0 %539
  %541 = vrot.lane.b32.xlu0 %v512, 32
  %v542 = vpop.permute.xlu0 %541
  %543 = vrot.lane.b32.xlu0 %v515, 32
  %v544 = vpop.permute.xlu0 %543
  %545 = vrot.lane.b32.xlu0 %v518, 32
  %v546 = vpop.permute.xlu0 %545
  %547 = vrot.lane.b32.xlu0 %v521, 32
  %v548 = vpop.permute.xlu0 %547
  %549 = vrot.lane.b32.xlu0 %v524, 32
  %v550 = vpop.permute.xlu0 %549
  %551 = vrot.lane.b32.xlu0 %v527, 32
  %v552 = vpop.permute.xlu0 %551
  %561 = vst.msk [vmem:[#allocation4] sm:$0xff] %vm197, %v538
  %562 = vst.msk [vmem:[#allocation4 + $0x8] sm:$0xff] %vm197, %v540
  %563 = vst.msk [vmem:[#allocation4 + $0x10] sm:$0xff] %vm197, %v542
  %564 = vst.msk [vmem:[#allocation4 + $0x18] sm:$0xff] %vm197, %v544
  %565 = vst.msk [vmem:[#allocation4 + $0x20] sm:$0xff] %vm197, %v546
  %566 = vst.msk [vmem:[#allocation4 + $0x28] sm:$0xff] %vm197, %v548
  %567 = vst.msk [vmem:[#allocation4 + $0x30] sm:$0xff] %vm197, %v550
  %568 = vst.msk [vmem:[#allocation4 + $0x38] sm:$0xff] %vm197, %v552
  %v569 = vld [vmem:[#allocation4] sm:$0xff]
  %v570 = vld [vmem:[#allocation4 + $0x8] sm:$0xff]
  %v571 = vld [vmem:[#allocation4 + $0x10] sm:$0xff]
  %v572 = vld [vmem:[#allocation4 + $0x18] sm:$0xff]
  %v573 = vld [vmem:[#allocation4 + $0x20] sm:$0xff]
  %v574 = vld [vmem:[#allocation4 + $0x28] sm:$0xff]
  %v575 = vld [vmem:[#allocation4 + $0x30] sm:$0xff]
  %v576 = vld [vmem:[#allocation4 + $0x38] sm:$0xff]
  %v577 = vld [vmem:[%s2] sm:$0xff]
  %v578 = vld [vmem:[%s2 + $0x8] sm:$0xff]
  %v579 = vld [vmem:[%s2 + $0x10] sm:$0xff]
  %v580 = vld [vmem:[%s2 + $0x18] sm:$0xff]
  %v581 = vld [vmem:[%s2 + $0x20] sm:$0xff]
  %v582 = vld [vmem:[%s2 + $0x28] sm:$0xff]
  %v583 = vld [vmem:[%s2 + $0x30] sm:$0xff]
  %v584 = vld [vmem:[%s2 + $0x38] sm:$0xff]
  %v585 = vld [vmem:[%s3] sm:$0x1]
  %v587 = vperm.slane %v585, 0
  %596 = vrot.lane.b32.xlu0 %v577, 112
  %v597 = vpop.permute.xlu0 %596
  %598 = vrot.lane.b32.xlu0 %v578, 112
  %v599 = vpop.permute.xlu0 %598
  %600 = vrot.lane.b32.xlu0 %v579, 112
  %v601 = vpop.permute.xlu0 %600
  %602 = vrot.lane.b32.xlu0 %v580, 112
  %v603 = vpop.permute.xlu0 %602
  %604 = vrot.lane.b32.xlu0 %v581, 112
  %v605 = vpop.permute.xlu0 %604
  %606 = vrot.lane.b32.xlu0 %v582, 112
  %v607 = vpop.permute.xlu0 %606
  %608 = vrot.lane.b32.xlu0 %v583, 112
  %v609 = vpop.permute.xlu0 %608
  %610 = vrot.lane.b32.xlu0 %v584, 112
  %v611 = vpop.permute.xlu0 %610
  %620 = vrot.lane.b32.xlu0 %v587, 112
  %v621 = vpop.permute.xlu0 %620
  %v624 = vsel %vm33, %v569, 0
  %v627 = vsel %vm33, %v570, 0
  %v630 = vsel %vm33, %v571, 0
  %v633 = vsel %vm33, %v572, 0
  %v636 = vsel %vm33, %v573, 0
  %v639 = vsel %vm33, %v574, 0
  %v642 = vsel %vm33, %v575, 0
  %v645 = vsel %vm33, %v576, 0
  %647 = vmatpush.msra.mxu0 0.0
  %648 = vmatpush.msra.mxu0 0.0
  %649 = vmatpush.msra.mxu0 0.0
  %650 = vmatpush.msra.mxu0 0.0
  %651 = vmatpush.msra.mxu0 0.0
  %652 = vmatpush.msra.mxu0 0.0
  %653 = vmatpush.msra.mxu0 0.0
  %654 = vmatpush.msra.mxu0 0.0
  %655 = vmatpush.msra.mxu0 %v611
  %656 = vmatpush.msra.mxu0 %v609
  %657 = vmatpush.msra.mxu0 %v607
  %658 = vmatpush.msra.mxu0 %v605
  %659 = vmatpush.msra.mxu0 %v603
  %660 = vmatpush.msra.mxu0 %v601
  %661 = vmatpush.msra.mxu0 %v599
  %662 = vmatpush.msra.mxu0 %v597
  %663 = vmatmul.f32.gmra.mxu0 %v624
  %v664 = vpop.f32.mrf.mxu0
  %v665 = vadd.f32 %v621, %v664
  %666 = vmatmul.f32.gmra.mxu0 %v627
  %v667 = vpop.f32.mrf.mxu0
  %v668 = vadd.f32 %v621, %v667
  %669 = vmatmul.f32.gmra.mxu0 %v630
  %v670 = vpop.f32.mrf.mxu0
  %v671 = vadd.f32 %v621, %v670
  %672 = vmatmul.f32.gmra.mxu0 %v633
  %v673 = vpop.f32.mrf.mxu0
  %v674 = vadd.f32 %v621, %v673
  %675 = vmatmul.f32.gmra.mxu0 %v636
  %v676 = vpop.f32.mrf.mxu0
  %v677 = vadd.f32 %v621, %v676
  %678 = vmatmul.f32.gmra.mxu0 %v639
  %v679 = vpop.f32.mrf.mxu0
  %v680 = vadd.f32 %v621, %v679
  %681 = vmatmul.f32.gmra.mxu0 %v642
  %v682 = vpop.f32.mrf.mxu0
  %v683 = vadd.f32 %v621, %v682
  %684 = vmatmul.f32.gmra.mxu0 %v645
  %v685 = vpop.f32.mrf.mxu0
  %v686 = vadd.f32 %v621, %v685
  %687 = vdwg.mxu0
  %vm688 = vcmask 64512
  %v689 = vsel %vm688, %v665, -inf
  %690 = vmax.xlane.f32.xlu0 %v689
  %v691 = vpop.xlane.xlu0 %690
  %v692 = vsel %vm688, %v668, -inf
  %693 = vmax.xlane.f32.xlu0 %v692
  %v694 = vpop.xlane.xlu0 %693
  %v695 = vsel %vm688, %v671, -inf
  %696 = vmax.xlane.f32.xlu0 %v695
  %v697 = vpop.xlane.xlu0 %696
  %v698 = vsel %vm688, %v674, -inf
  %699 = vmax.xlane.f32.xlu0 %v698
  %v700 = vpop.xlane.xlu0 %699
  %v701 = vsel %vm688, %v677, -inf
  %702 = vmax.xlane.f32.xlu0 %v701
  %v703 = vpop.xlane.xlu0 %702
  %v704 = vsel %vm688, %v680, -inf
  %705 = vmax.xlane.f32.xlu0 %v704
  %v706 = vpop.xlane.xlu0 %705
  %v707 = vsel %vm688, %v683, -inf
  %708 = vmax.xlane.f32.xlu0 %v707
  %v709 = vpop.xlane.xlu0 %708
  %v710 = vsel %vm688, %v686, -inf
  %711 = vmax.xlane.f32.xlu0 %v710
  %v712 = vpop.xlane.xlu0 %711
  %v713 = vsub.f32 %v665, %v691
  %v714 = vsub.f32 %v668, %v694
  %v715 = vsub.f32 %v671, %v697
  %v716 = vsub.f32 %v674, %v700
  %v717 = vsub.f32 %v677, %v703
  %v718 = vsub.f32 %v680, %v706
  %v719 = vsub.f32 %v683, %v709
  %v720 = vsub.f32 %v686, %v712
  %v721 = vmul.f32 %v713, 1.442695
  %v722 = vpow.pop %v721
  %v723 = vmul.f32 %v714, 1.442695
  %v724 = vpow.pop %v723
  %v725 = vmul.f32 %v715, 1.442695
  %v726 = vpow.pop %v725
  %v727 = vmul.f32 %v716, 1.442695
  %v728 = vpow.pop %v727
  %v729 = vmul.f32 %v717, 1.442695
  %v730 = vpow.pop %v729
  %v731 = vmul.f32 %v718, 1.442695
  %v732 = vpow.pop %v731
  %v733 = vmul.f32 %v719, 1.442695
  %v734 = vpow.pop %v733
  %v735 = vmul.f32 %v720, 1.442695
  %v736 = vpow.pop %v735
  %v737 = vsel %vm688, %v722, 0.0
  %738 = vadd.xlane.f32.xlu0 %v737
  %v739 = vpop.xlane.xlu0 %738
  %v740 = vsel %vm688, %v724, 0.0
  %741 = vadd.xlane.f32.xlu0 %v740
  %v742 = vpop.xlane.xlu0 %741
  %v743 = vsel %vm688, %v726, 0.0
  %744 = vadd.xlane.f32.xlu0 %v743
  %v745 = vpop.xlane.xlu0 %744
  %v746 = vsel %vm688, %v728, 0.0
  %747 = vadd.xlane.f32.xlu0 %v746
  %v748 = vpop.xlane.xlu0 %747
  %v749 = vsel %vm688, %v730, 0.0
  %750 = vadd.xlane.f32.xlu0 %v749
  %v751 = vpop.xlane.xlu0 %750
  %v752 = vsel %vm688, %v732, 0.0
  %753 = vadd.xlane.f32.xlu0 %v752
  %v754 = vpop.xlane.xlu0 %753
  %v755 = vsel %vm688, %v734, 0.0
  %756 = vadd.xlane.f32.xlu0 %v755
  %v757 = vpop.xlane.xlu0 %756
  %v758 = vsel %vm688, %v736, 0.0
  %759 = vadd.xlane.f32.xlu0 %v758
  %v760 = vpop.xlane.xlu0 %759
  %v761 = vlog2.pop %v739
  %v762 = vmul.f32 %v761, 0.6931472
  %v763 = vlog2.pop %v742
  %v764 = vmul.f32 %v763, 0.6931472
  %v765 = vlog2.pop %v745
  %v766 = vmul.f32 %v765, 0.6931472
  %v767 = vlog2.pop %v748
  %v768 = vmul.f32 %v767, 0.6931472
  %v769 = vlog2.pop %v751
  %v770 = vmul.f32 %v769, 0.6931472
  %v771 = vlog2.pop %v754
  %v772 = vmul.f32 %v771, 0.6931472
  %v773 = vlog2.pop %v757
  %v774 = vmul.f32 %v773, 0.6931472
  %v775 = vlog2.pop %v760
  %v776 = vmul.f32 %v775, 0.6931472
  %v777 = vsub.f32 %v713, %v762
  %v778 = vsub.f32 %v714, %v764
  %v779 = vsub.f32 %v715, %v766
  %v780 = vsub.f32 %v716, %v768
  %v781 = vsub.f32 %v717, %v770
  %v782 = vsub.f32 %v718, %v772
  %v783 = vsub.f32 %v719, %v774
  %v784 = vsub.f32 %v720, %v776
  %785 = vst.msk [vmem:[%s4] sm:$0xff] %vm688, %v777
  %786 = vst.msk [vmem:[%s4 + $0x8] sm:$0xff] %vm688, %v778
  %787 = vst.msk [vmem:[%s4 + $0x10] sm:$0xff] %vm688, %v779
  %788 = vst.msk [vmem:[%s4 + $0x18] sm:$0xff] %vm688, %v780
  %789 = vst.msk [vmem:[%s4 + $0x20] sm:$0xff] %vm688, %v781
  %790 = vst.msk [vmem:[%s4 + $0x28] sm:$0xff] %vm688, %v782
  %791 = vst.msk [vmem:[%s4 + $0x30] sm:$0xff] %vm688, %v783
  %792 = vst.msk [vmem:[%s4 + $0x38] sm:$0xff] %vm688, %v784
  // Predicated region
  $region18: #{tpu_custom_call.1} parent=0 // pred_check
    _
  $region19: #{tpu_custom_call.1} parent=0 // pred_check_branch
    %794 = sbr.rel (0) target = $region21
  $region20: #{tpu_custom_call.1} parent=0 // pred_region
    _
  $region21: #{tpu_custom_call.1} parent=0 // pred_fallthru
    _
  // Predicated region
  $region22: #{tpu_custom_call.1} parent=0 // pred_check
    _
  $region23: #{tpu_custom_call.1} parent=0 // pred_check_branch
    %796 = sbr.rel (0) target = $region25
  $region24: #{tpu_custom_call.1} parent=0 // pred_region
    _
  $region25: #{tpu_custom_call.1} parent=0 // pred_fallthru
    _

</llo_original>
